<compile_context>
chip_gen: v6e
topology: v6e:2x2x1
jax: 0.10.0
libtpu: 0.0.40
codegen_flags: <defaults>
</compile_context>

<pallas_src>
import functools

import jax
import jax.numpy as jnp
from jax.experimental import pallas as pl
from jax.experimental.pallas import tpu as pltpu

_TILE_S_MAX = 2048   # lanes per block (f32): tiny VMEM footprint, large enough
                     # to amortize the ~0.35 us per-grid-step overhead.


def _round_up(x, m):
    return (x + m - 1) // m * m


def _out_kernel(x_ref, w_ref, b_ref, o_ref, *, use_sigmoid):
    """One (Cin, TILE_S) spatial slab -> (Cout, TILE_S) class probabilities."""
    x = x_ref[...]                                    # (Cin, TILE_S) f32
    w = w_ref[...]                                    # (Cout, Cin)   f32 (resident)
    # 1x1 convolution == per-voxel channel matmul (MXU, f32 accumulation).
    logits = jnp.dot(w, x, preferred_element_type=jnp.float32) + b_ref[...]
    if use_sigmoid:
        # out_channels == 2  ->  elementwise sigmoid (per the PyTorch module)
        o_ref[...] = 1.0 / (1.0 + jnp.exp(-logits))
    else:
        # softmax over the channel (sublane) axis, numerically stable
        m = jnp.max(logits, axis=0, keepdims=True)
        e = jnp.exp(logits - m)
        o_ref[...] = e / jnp.sum(e, axis=0, keepdims=True)


@jax.jit
def out_forward(x, weight, bias):
    """
    x      : (N, Cin, *spatial)          float32   (NCDHW for is3d, NCHW for 2d)
    weight : (Cout, Cin, 1[,1[,1]])      float32   (PyTorch Conv{2,3}d, kernel_size=1)
    bias   : (Cout,)                     float32
    returns: (N, Cout, *spatial)         float32
    """
    n, cin = x.shape[0], x.shape[1]
    spatial = x.shape[2:]
    cout = weight.shape[0]
    s = 1
    for d in spatial:
        s *= d

    w2 = weight.reshape(cout, cin).astype(jnp.float32)   # drop the 1x1(x1) kernel dims
    b2 = bias.reshape(cout, 1).astype(jnp.float32)

    x2 = x.astype(jnp.float32).reshape(n, cin, s)
    tile_s = min(_TILE_S_MAX, _round_up(s, 128))
    s_pad = _round_up(s, tile_s)
    if s_pad != s:
        x2 = jnp.pad(x2, ((0, 0), (0, 0), (0, s_pad - s)))

    kernel = functools.partial(_out_kernel, use_sigmoid=(cout == 2))

    out = pl.pallas_call(
        kernel,
        out_shape=jax.ShapeDtypeStruct((n, cout, s_pad), jnp.float32),
        grid=(n, s_pad // tile_s),
        in_specs=[
            # x tile: (Cin, TILE_S); lane dim is spatial -> dense loads
            pl.BlockSpec((None, cin, tile_s), lambda i, j: (i, 0, j)),
            # weight / bias: constant index_map -> resident in VMEM
            pl.BlockSpec((cout, cin), lambda i, j: (0, 0)),
            pl.BlockSpec((cout, 1), lambda i, j: (0, 0)),
        ],
        # output tile: (Cout, TILE_S); lane-dense stores regardless of Cout
        out_specs=pl.BlockSpec((None, cout, tile_s), lambda i, j: (i, 0, j)),
        compiler_params=pltpu.CompilerParams(
            dimension_semantics=("parallel", "parallel"),
            vmem_limit_bytes=32 * 1024 * 1024,
        ),
    )(x2, w2, b2)

    if s_pad != s:
        out = out[:, :, :s]
    return out.reshape((n, cout) + spatial)


def _reference(x, weight, bias):
    """Pure-JAX reference matching the PyTorch `Out.forward` semantics."""
    n, cin = x.shape[0], x.shape[1]
    cout = weight.shape[0]
    w2 = weight.reshape(cout, cin).astype(jnp.float32)
    xs = x.astype(jnp.float32).reshape(n, cin, -1)
    # exact f32 contraction on the VPU (avoids any XLA matmul-precision ambiguity)
    y = jnp.sum(w2[None, :, :, None] * xs[:, None, :, :], axis=2)
    y = y + bias.astype(jnp.float32)[None, :, None]
    if cout == 2:
        y = jax.nn.sigmoid(y)
    else:
        y = jax.nn.softmax(y, axis=1)
    return y.reshape((n, cout) + x.shape[2:])


if __name__ == "__main__":
    # Small shapes consistent with the module (is3d=True, kernel_size=1).
    N, C_IN, D, H, W = 2, 4, 16, 16, 16

    key = jax.random.PRNGKey(0)
    kx, kw1, kb1, kw2, kb2 = jax.random.split(key, 5)

    x = jax.random.normal(kx, (N, C_IN, D, H, W), dtype=jnp.float32)
    bound = 1.0 / (C_IN ** 0.5)   # nn.Conv3d default init bound for k=1

    # --- multi-class head (Cout=3)  ->  softmax over channels ------------
    C_OUT = 3
    w3 = jax.random.uniform(kw1, (C_OUT, C_IN, 1, 1, 1),
                            minval=-bound, maxval=bound, dtype=jnp.float32)
    b3 = jax.random.uniform(kb1, (C_OUT,), minval=-bound, maxval=bound,
                            dtype=jnp.float32)
    out3 = jax.block_until_ready(out_forward(x, w3, b3))
    ref3 = _reference(x, w3, b3)
    assert out3.shape == (N, C_OUT, D, H, W)
    assert jnp.allclose(out3, ref3, rtol=1e-4, atol=1e-4)

    # --- binary head (Cout=2)  ->  sigmoid --------------------------------
    w2_ = jax.random.uniform(kw2, (2, C_IN, 1, 1, 1),
                             minval=-bound, maxval=bound, dtype=jnp.float32)
    b2_ = jax.random.uniform(kb2, (2,), minval=-bound, maxval=bound,
                             dtype=jnp.float32)
    out2 = jax.block_until_ready(out_forward(x, w2_, b2_))
    ref2 = _reference(x, w2_, b2_)
    assert out2.shape == (N, 2, D, H, W)
    assert jnp.allclose(out2, ref2, rtol=1e-4, atol=1e-4)

    print("KERNEL_OK")
</pallas_src>

<mosaic_0001>
module attributes {stable_mosaic.version = 11 : i64} {
  func.func @_out_kernel(%arg0: i32, %arg1: i32, %arg2: memref<1x4x2048xf32, #tpu.memory_space<vmem>>, %arg3: memref<3x4xf32, #tpu.memory_space<vmem>>, %arg4: memref<3x1xf32, #tpu.memory_space<vmem>>, %arg5: memref<1x3x2048xf32, #tpu.memory_space<vmem>>) attributes {dimension_semantics = [#tpu.dimension_semantics<parallel>, #tpu.dimension_semantics<parallel>], iteration_bounds = array<i64: 2, 2>, scalar_prefetch = 0 : i64, scratch_operands = 0 : i64, tpu.core_type = #tpu.core_type<tc>, window_params = [{transform_indices = @transform_0, window_bounds = array<i64: 1, 4, 2048>}, {pipeline_mode = #tpu.pipeline_mode<synchronous>, transform_indices = @transform_1, window_bounds = array<i64: 3, 4>}, {pipeline_mode = #tpu.pipeline_mode<synchronous>, transform_indices = @transform_2, window_bounds = array<i64: 3, 1>}, {transform_indices = @transform_3, window_bounds = array<i64: 1, 3, 2048>}]} {
    %c0 = arith.constant 0 : index
    %c0_0 = arith.constant 0 : index
    %c0_1 = arith.constant 0 : index
    %0 = vector.load %arg2[%c0, %c0_0, %c0_1] : memref<1x4x2048xf32, #tpu.memory_space<vmem>>, vector<1x4x2048xf32>
    %1 = vector.shape_cast %0 : vector<1x4x2048xf32> to vector<4x2048xf32>
    %c0_2 = arith.constant 0 : index
    %c0_3 = arith.constant 0 : index
    %2 = vector.load %arg3[%c0_2, %c0_3] : memref<3x4xf32, #tpu.memory_space<vmem>>, vector<3x4xf32>
    %cst = arith.constant dense<0.000000e+00> : vector<3x2048xf32>
    %3 = tpu.matmul %2, %1, %cst {dimension_numbers = #tpu.dot_dimension_numbers<[1], [0], [0], [1], [0, 0, 1, 1], [], []>} : vector<3x4xf32>, vector<4x2048xf32>, vector<3x2048xf32> -> vector<3x2048xf32>
    %c0_4 = arith.constant 0 : index
    %c0_5 = arith.constant 0 : index
    %4 = vector.load %arg4[%c0_4, %c0_5] : memref<3x1xf32, #tpu.memory_space<vmem>>, vector<3x1xf32>
    %5 = vector.broadcast %4 : vector<3x1xf32> to vector<3x2048xf32>
    %6 = arith.addf %3, %5 : vector<3x2048xf32>
    %cst_6 = arith.constant dense<0xFF800000> : vector<2048xf32>
    %7 = vector.multi_reduction <maximumf>, %6, %cst_6 [0] : vector<3x2048xf32> to vector<2048xf32>
    %8 = vector.shape_cast %7 : vector<2048xf32> to vector<1x2048xf32>
    %9 = vector.broadcast %8 : vector<1x2048xf32> to vector<3x2048xf32>
    %10 = arith.subf %6, %9 : vector<3x2048xf32>
    %11 = math.exp %10 : vector<3x2048xf32>
    %cst_7 = arith.constant dense<0.000000e+00> : vector<2048xf32>
    %12 = vector.multi_reduction <add>, %11, %cst_7 [0] : vector<3x2048xf32> to vector<2048xf32>
    %13 = vector.shape_cast %12 : vector<2048xf32> to vector<1x2048xf32>
    %14 = vector.broadcast %13 : vector<1x2048xf32> to vector<3x2048xf32>
    %15 = arith.divf %11, %14 : vector<3x2048xf32>
    %c0_8 = arith.constant 0 : index
    %c0_9 = arith.constant 0 : index
    %c0_10 = arith.constant 0 : index
    %16 = vector.load %arg5[%c0_8, %c0_9, %c0_10] : memref<1x3x2048xf32, #tpu.memory_space<vmem>>, vector<1x3x2048xf32>
    %17 = vector.shape_cast %16 : vector<1x3x2048xf32> to vector<3x2048xf32>
    %18 = vector.shape_cast %15 : vector<3x2048xf32> to vector<1x3x2048xf32>
    tpu.vector_store %arg5[%c0_8, %c0_9, %c0_10], %18 {strides = array<i32>} : memref<1x3x2048xf32, #tpu.memory_space<vmem>>, vector<1x3x2048xf32>,
    return
  }
  func.func @transform_0(%arg0: i32, %arg1: i32) -> (i32, i32, i32) {
    %c0_i32 = arith.constant 0 : i32
    %c0_i32_0 = arith.constant 0 : i32
    return %arg0, %c0_i32, %arg1 : i32, i32, i32
  }
  func.func @transform_1(%arg0: i32, %arg1: i32) -> (i32, i32) {
    %c0_i32 = arith.constant 0 : i32
    %c0_i32_0 = arith.constant 0 : i32
    %c0_i32_1 = arith.constant 0 : i32
    return %c0_i32, %c0_i32_0 : i32, i32
  }
  func.func @transform_2(%arg0: i32, %arg1: i32) -> (i32, i32) {
    %c0_i32 = arith.constant 0 : i32
    %c0_i32_0 = arith.constant 0 : i32
    %c0_i32_1 = arith.constant 0 : i32
    return %c0_i32, %c0_i32_0 : i32, i32
  }
  func.func @transform_3(%arg0: i32, %arg1: i32) -> (i32, i32, i32) {
    %c0_i32 = arith.constant 0 : i32
    %c0_i32_0 = arith.constant 0 : i32
    return %arg0, %c0_i32, %arg1 : i32, i32, i32
  }
}

</mosaic_0001>

<llo_original>
// kernel: out_forward.1
$region0: #{out_forward.1}
  #allocation0 [shape = 'u32[]', space=smem, size = 0x4, offset = 0x4, fixed_abs, tag = 'smem constant byte address 0x4 - core index']
  #allocation1 [shape = 'u32[144,128]{1,0:T(1,128)}', space=vmem, size = 0x12000, scoped, tag = 'internal scratch']
  %s0 = inlined_call_operand.vmem [shape: f32[2,4,4096], index: 0, kind: input, shape index: {}]
  %s1 = inlined_call_operand.vmem [shape: f32[3,4], index: 1, kind: input, shape index: {}]
  %s2 = inlined_call_operand.vmem [shape: f32[3,1], index: 2, kind: input, shape index: {}]
  %s3 = inlined_call_operand.vmem [shape: f32[2,3,4096], index: 3, kind: output, shape index: {}]
  %s4 = sld [smem:[#allocation0]]
  $region45: #{out_forward.1} parent=0
    _
  %s6 = ssub.s32 1, %s4
  %s7 = scalar_select 0, %s6, %s4
  loop: start=0, step=1, limit=6
  $region2: #{out_forward.1} parent=0 // loop_pre_header
    _
  $region3: #{out_forward.1} parent=0 // loop_header
    %s9 = sphi 0, %s13
    %p10 = scmp.ge.s32.totalorder %s9, 6
    %s16 = sphi 0, %s28
    %s17 = sphi 0, %s24
    %s18 = sphi 0, %s16
    %s19 = sphi 0, %s17
    %s20 = sphi 0, %s18
    %s21 = sphi 0, %s19
    %s33 = sphi 0, %s35
    %s36 = sphi 0, %s33
    %s37 = sphi 0, %s36
    %s53 = sphi 0, %s37
    %s57 = sphi 0, %s57
    %s59 = sphi 0, %s57
    %s60 = sphi 0, %s59
    %s74 = sphi 0, %s60
    %s78 = sphi 0, %s78
    %s80 = sphi 0, %s78
    %s81 = sphi 0, %s80
    %s95 = sphi 0, %s81
    %s103 = sphi 0, %s105
    %s106 = sphi 0, %s103
    %s107 = sphi 0, %s106
    %s123 = sphi 0, %s107
  $region4: #{out_forward.1} parent=0 // loop_header_branch
    %12 = sbr.rel (%p10) target = $region8
  $region5: #{out_forward.1} parent=0 // loop_body
    %s14 = ssub.s32 %s9, 1
    %s15 = ssub.s32 %s9, 2
    %s22 = sadd.s32 1, %s17
    %p23 = scmp.ge.s32.totalorder %s22, 2
    %s24 = scalar_select %p23, 0, %s22
    %s25 = sadd.s32 1, %s16
    %s26 = scalar_select %p23, %s25, %s16
    %p27 = scmp.ge.s32.totalorder %s26, 2
    %s28 = scalar_select %p27, 0, %s26
    %s29 = ssub.s32 %s16, %s28
    %s30 = ssub.s32 %s17, %s24
    %s31 = sor.u32 %s29, %s30
    %p32 = scmp.eq.s32.totalorder %s31, 0
    %s34 = sadd.s32 %s33, 1
    %s35 = scalar_select %p32, %s33, %s34
    %p38 = pneg %p32
    %p39 = scmp.eq.s32.totalorder %s9, 3
    %p40 = por %p38, %p39
    %p41 = scmp.ne.s32.totalorder %s33, %s36
    %p42 = scmp.eq.s32.totalorder %s9, 0
    %p43 = por %p41, %p42
    %p44 = scmp.ne.s32.totalorder %s33, %s36
    %p45 = scmp.eq.s32.totalorder %s14, 3
    %p46 = por %p44, %p45
    %p47 = scmp.ne.s32.totalorder %s36, %s37
    %p48 = scmp.eq.s32.totalorder %s14, 0
    %p49 = por %p47, %p48
    %p50 = scmp.ne.s32.totalorder %s36, %s37
    %p51 = scmp.eq.s32.totalorder %s15, 3
    %p52 = por %p50, %p51
    %p54 = scmp.ne.s32.totalorder %s37, %s53
    %p55 = scmp.eq.s32.totalorder %s15, 0
    %p56 = por %p54, %p55
    %s58 = sadd.s32 %s57, 1
    %p61 = scmp.eq.s32.totalorder %s9, 3
    %p62 = scmp.ne.s32.totalorder %s57, %s59
    %p63 = scmp.eq.s32.totalorder %s9, 0
    %p64 = por %p62, %p63
    %p65 = scmp.ne.s32.totalorder %s57, %s59
    %p66 = scmp.eq.s32.totalorder %s14, 3
    %p67 = por %p65, %p66
    %p68 = scmp.ne.s32.totalorder %s59, %s60
    %p69 = scmp.eq.s32.totalorder %s14, 0
    %p70 = por %p68, %p69
    %p71 = scmp.ne.s32.totalorder %s59, %s60
    %p72 = scmp.eq.s32.totalorder %s15, 3
    %p73 = por %p71, %p72
    %p75 = scmp.ne.s32.totalorder %s60, %s74
    %p76 = scmp.eq.s32.totalorder %s15, 0
    %p77 = por %p75, %p76
    %s79 = sadd.s32 %s78, 1
    %p82 = scmp.eq.s32.totalorder %s9, 3
    %p83 = scmp.ne.s32.totalorder %s78, %s80
    %p84 = scmp.eq.s32.totalorder %s9, 0
    %p85 = por %p83, %p84
    %p86 = scmp.ne.s32.totalorder %s78, %s80
    %p87 = scmp.eq.s32.totalorder %s14, 3
    %p88 = por %p86, %p87
    %p89 = scmp.ne.s32.totalorder %s80, %s81
    %p90 = scmp.eq.s32.totalorder %s14, 0
    %p91 = por %p89, %p90
    %p92 = scmp.ne.s32.totalorder %s80, %s81
    %p93 = scmp.eq.s32.totalorder %s15, 3
    %p94 = por %p92, %p93
    %p96 = scmp.ne.s32.totalorder %s81, %s95
    %p97 = scmp.eq.s32.totalorder %s15, 0
    %p98 = por %p96, %p97
    %s99 = ssub.s32 %s16, %s28
    %s100 = ssub.s32 %s17, %s24
    %s101 = sor.u32 %s99, %s100
    %p102 = scmp.eq.s32.totalorder %s101, 0
    %s104 = sadd.s32 %s103, 1
    %s105 = scalar_select %p102, %s103, %s104
    %p108 = pneg %p102
    %p109 = scmp.eq.s32.totalorder %s9, 3
    %p110 = por %p108, %p109
    %p111 = scmp.ne.s32.totalorder %s103, %s106
    %p112 = scmp.eq.s32.totalorder %s9, 0
    %p113 = por %p111, %p112
    %p114 = scmp.ne.s32.totalorder %s103, %s106
    %p115 = scmp.eq.s32.totalorder %s14, 3
    %p116 = por %p114, %p115
    %p117 = scmp.ne.s32.totalorder %s106, %s107
    %p118 = scmp.eq.s32.totalorder %s14, 0
    %p119 = por %p117, %p118
    %p120 = scmp.ne.s32.totalorder %s106, %s107
    %p121 = scmp.eq.s32.totalorder %s15, 3
    %p122 = por %p120, %p121
    %p124 = scmp.ne.s32.totalorder %s107, %s123
    %p125 = scmp.eq.s32.totalorder %s15, 0
    %p126 = por %p124, %p125
    %p127 = scmp.le.s32.totalorder 1, %s9
    %p128 = scmp.lt.s32.totalorder %s9, 5
    %p129 = pnand %p127, %p128
    %p130 = pneg %p129
    // Predicated region
    $region9: #{out_forward.1} parent=5 // pred_check
      _
    $region10: #{out_forward.1} parent=5 // pred_check_branch
      %132 = sbr.rel (%p129) target = $region12
    $region11: #{out_forward.1} parent=5 // pred_region
      %s133 = ssub.s32 %s9, 1
      // Predicated region
      $region13: #{out_forward.1} parent=11 // pred_check
        %p134 = pneg %p70
      $region14: #{out_forward.1} parent=11 // pred_check_branch
        %136 = sbr.rel (%p134) target = $region16
      $region15: #{out_forward.1} parent=11 // pred_region
        _
      $region16: #{out_forward.1} parent=11 // pred_fallthru
        _
      // Predicated region
      $region17: #{out_forward.1} parent=11 // pred_check
        %p137 = pneg %p91
      $region18: #{out_forward.1} parent=11 // pred_check_branch
        %139 = sbr.rel (%p137) target = $region20
      $region19: #{out_forward.1} parent=11 // pred_region
        _
      $region20: #{out_forward.1} parent=11 // pred_fallthru
        _
    $region12: #{out_forward.1} parent=5 // pred_fallthru
      _
    %p140 = scmp.lt.s32.totalorder %s9, 4
    // Predicated region
    $region21: #{out_forward.1} parent=5 // pred_check
      %p141 = pneg %p140
    $region22: #{out_forward.1} parent=5 // pred_check_branch
      %143 = sbr.rel (%p141) target = $region24
    $region23: #{out_forward.1} parent=5 // pred_region
      // Predicated region
      $region25: #{out_forward.1} parent=23 // pred_check
        %p144 = pneg %p43
      $region26: #{out_forward.1} parent=23 // pred_check_branch
        %146 = sbr.rel (%p144) target = $region28
      $region27: #{out_forward.1} parent=23 // pred_region
        %s147 = smul.u32 16, %s17
        %p148 = scmp.lt.s32.totalorder %s16, 1
        %s149 = scalar_select %p148, %s16, 1
        %p150 = scmp.lt.s32.totalorder %s147, 31
        %s151 = scalar_select %p150, %s147, 31
        %s152 = smul.addr %s149, 32
        %s153 = sadd.s32 %s151, %s152
        %s154 = smul.addr %s153, 4
        %s155 = scalar_lea.vmem %s0, %s154
        %s156 = smul.u32 16, %s17
      $region28: #{out_forward.1} parent=23 // pred_fallthru
        _
    $region24: #{out_forward.1} parent=5 // pred_fallthru
      _
    %p157 = scmp.le.s32.totalorder 1, %s9
    %p158 = scmp.lt.s32.totalorder %s9, 5
    %p159 = pnand %p157, %p158
    %p160 = pneg %p159
    // Predicated region
    $region29: #{out_forward.1} parent=5 // pred_check
      _
    $region30: #{out_forward.1} parent=5 // pred_check_branch
      %162 = sbr.rel (%p159) target = $region32
    $region31: #{out_forward.1} parent=5 // pred_region
      %s163 = ssub.s32 %s9, 1
      %s164 = smul.u32 16, %s19
      %p165 = scmp.lt.s32.totalorder %s18, 1
      %s166 = scalar_select %p165, %s18, 1
      %p167 = scmp.lt.s32.totalorder %s164, 31
      %s168 = scalar_select %p167, %s164, 31
      %s169 = smul.addr %s166, 32
      %s170 = sadd.s32 %s168, %s169
      %s171 = smul.addr %s170, 4
      %s172 = scalar_lea.vmem %s0, %s171
      %p173 = pneg %p49
      %p174 = pneg %p46
      %p175 = pneg %p70
      %p176 = pneg %p67
      %p177 = pneg %p91
      %p178 = pneg %p88
      %p179 = pneg %p119
      %p180 = pneg %p116
      %s181 = smul.u32 16, %s19
      %p182 = scmp.lt.s32.totalorder %s18, 1
      %s183 = scalar_select %p182, %s18, 1
      %p184 = scmp.lt.s32.totalorder %s181, 31
      %s185 = scalar_select %p184, %s181, 31
      %s186 = smul.addr %s183, 32
      %s187 = sadd.s32 %s185, %s186
      %s188 = smul.addr %s187, 4
      %s189 = scalar_lea.vmem %s3, %s188
      %s190 = smul.u32 16, %s19
      %p191 = scmp.lt.s32.totalorder %s18, 1
      %s192 = scalar_select %p191, %s18, 1
      %p193 = scmp.lt.s32.totalorder %s190, 31
      %s194 = scalar_select %p193, %s190, 31
      %s195 = smul.addr %s192, 32
      %s196 = sadd.s32 %s194, %s195
      %s197 = smul.addr %s196, 4
      %s198 = scalar_lea.vmem %s0, %s197
      %s199 = smul.u32 16, %s19
      %s200 = smul.u32 16, %s19
      %p201 = scmp.lt.s32.totalorder %s18, 1
      %s202 = scalar_select %p201, %s18, 1
      %p203 = scmp.lt.s32.totalorder %s200, 31
      %s204 = scalar_select %p203, %s200, 31
      %s205 = smul.addr %s202, 32
      %s206 = sadd.s32 %s204, %s205
      %s207 = smul.addr %s206, 4
      %s208 = scalar_lea.vmem %s3, %s207
      %s209 = smul.u32 16, %s19
      %v210 = vld [vmem:[%s198] sm:$0xff]
      %v211 = vld [vmem:[%s198 + $0x8] sm:$0xff]
      %v212 = vld [vmem:[%s198 + $0x10] sm:$0xff]
      %v213 = vld [vmem:[%s198 + $0x18] sm:$0xff]
      %v214 = vld [vmem:[%s198 + $0x20] sm:$0xff]
      %v215 = vld [vmem:[%s198 + $0x28] sm:$0xff]
      %v216 = vld [vmem:[%s198 + $0x30] sm:$0xff]
      %v217 = vld [vmem:[%s198 + $0x38] sm:$0xff]
      %v218 = vld [vmem:[%s1] sm:$0x7]
      %v219 = vld [vmem:[%s2] sm:$0x7]
      %221 = vset.pattern.permute.xlu0 0
      %222 = vperm.xlu0 %221, %v219
      %v223 = vpop.permute.xlu0 %222
      %v233 = vcombine.high %v210, %v210
      %v234 = vcombine.high %v211, %v211
      %v235 = vcombine.high %v212, %v212
      %v236 = vcombine.high %v213, %v213
      %v237 = vcombine.high %v214, %v214
      %v238 = vcombine.high %v215, %v215
      %v239 = vcombine.high %v216, %v216
      %v240 = vcombine.high %v217, %v217
      %vm241 = vcmask 31744
      %v243 = vsel %vm241, %v218, 0
      %vm245 = vcmask 1043456
      %v246 = vsel %vm245, %v210, 0
      %v248 = vsel %vm245, %v233, 0
      %v250 = vsel %vm245, %v211, 0
      %v252 = vsel %vm245, %v234, 0
      %v254 = vsel %vm245, %v212, 0
      %v256 = vsel %vm245, %v235, 0
      %v258 = vsel %vm245, %v213, 0
      %v260 = vsel %vm245, %v236, 0
      %v262 = vsel %vm245, %v214, 0
      %v264 = vsel %vm245, %v237, 0
      %v266 = vsel %vm245, %v215, 0
      %v268 = vsel %vm245, %v238, 0
      %v270 = vsel %vm245, %v216, 0
      %v272 = vsel %vm245, %v239, 0
      %v274 = vsel %vm245, %v217, 0
      %v276 = vsel %vm245, %v240, 0
      %278 = vmatprep.subr.mxu0 0.0
      %279 = vmatpush1.msra.mxu0 0.0
      %280 = vmatprep.subr.mxu0 0.0
      %281 = vmatpush1.msra.mxu0 0.0
      %282 = vmatprep.subr.mxu0 0.0
      %283 = vmatpush1.msra.mxu0 0.0
      %284 = vmatprep.subr.mxu0 0.0
      %285 = vmatpush1.msra.mxu0 0.0
      %286 = vmatprep.subr.mxu0 0.0
      %287 = vmatpush1.msra.mxu0 0.0
      %288 = vmatprep.subr.mxu0 0.0
      %289 = vmatpush1.msra.mxu0 0.0
      %290 = vmatprep.subr.mxu0 0.0
      %291 = vmatpush1.msra.mxu0 0.0
      %292 = vmatprep.subr.mxu0 0.0
      %293 = vmatpush1.msra.mxu0 0.0
      %294 = vmatprep.subr.mxu0 0.0
      %295 = vmatpush1.msra.mxu0 0.0
      %296 = vmatprep.subr.mxu0 0.0
      %297 = vmatpush1.msra.mxu0 0.0
      %298 = vmatprep.subr.mxu0 0.0
      %299 = vmatpush1.msra.mxu0 0.0
      %300 = vmatprep.subr.mxu0 0.0
      %301 = vmatpush1.msra.mxu0 0.0
      %302 = vmatprep.subr.mxu0 0.0
      %303 = vmatpush1.msra.mxu0 0.0
      %304 = vmatprep.subr.mxu0 0.0
      %305 = vmatpush1.msra.mxu0 0.0
      %306 = vmatprep.subr.mxu0 0.0
      %307 = vmatpush1.msra.mxu0 0.0
      %308 = vmatprep.subr.mxu0 %v248
      %309 = vmatpush1.msra.mxu0 %v246
      %310 = vmatprep.subr.mxu0 0.0
      %311 = vmatpush2.msra.mxu0 0.0
      %312 = vmatprep.subr.mxu0 0.0
      %313 = vmatpush2.msra.mxu0 0.0
      %314 = vmatprep.subr.mxu0 0.0
      %315 = vmatpush2.msra.mxu0 0.0
      %316 = vmatprep.subr.mxu0 0.0
      %317 = vmatpush2.msra.mxu0 0.0
      %318 = vmatprep.subr.mxu0 0.0
      %319 = vmatpush2.msra.mxu0 0.0
      %320 = vmatprep.subr.mxu0 0.0
      %321 = vmatpush2.msra.mxu0 0.0
      %322 = vmatprep.subr.mxu0 0.0
      %323 = vmatpush2.msra.mxu0 0.0
      %324 = vmatprep.subr.mxu0 0.0
      %325 = vmatpush2.msra.mxu0 0.0
      %326 = vmatprep.subr.mxu0 0.0
      %327 = vmatpush2.msra.mxu0 0.0
      %328 = vmatprep.subr.mxu0 0.0
      %329 = vmatpush2.msra.mxu0 0.0
      %330 = vmatprep.subr.mxu0 0.0
      %331 = vmatpush2.msra.mxu0 0.0
      %332 = vmatprep.subr.mxu0 0.0
      %333 = vmatpush2.msra.mxu0 0.0
      %334 = vmatprep.subr.mxu0 0.0
      %335 = vmatpush2.msra.mxu0 0.0
      %336 = vmatprep.subr.mxu0 0.0
      %337 = vmatpush2.msra.mxu0 0.0
      %338 = vmatprep.subr.mxu0 0.0
      %339 = vmatpush2.msra.mxu0 0.0
      %340 = vmatprep.subr.mxu0 0.0
      %341 = vmatpush2.msra.mxu0 0.0
      %342 = vmatprep.mubr.f32.mxu0 0.0
      %343 = vmatmul.mubr.f32.gmra.mxu0 %v243
      %v344 = vpop.f32.mrf.mxu0
      %v345 = vadd.f32 %v223, %v344
      %v346 = vpop.f32.mrf.mxu0
      %v347 = vadd.f32 %v223, %v346
      %348 = vdwg.mxu0
      %349 = vmatprep.subr.mxu0 0.0
      %350 = vmatpush1.msra.mxu0 0.0
      %351 = vmatprep.subr.mxu0 0.0
      %352 = vmatpush1.msra.mxu0 0.0
      %353 = vmatprep.subr.mxu0 0.0
      %354 = vmatpush1.msra.mxu0 0.0
      %355 = vmatprep.subr.mxu0 0.0
      %356 = vmatpush1.msra.mxu0 0.0
      %357 = vmatprep.subr.mxu0 0.0
      %358 = vmatpush1.msra.mxu0 0.0
      %359 = vmatprep.subr.mxu0 0.0
      %360 = vmatpush1.msra.mxu0 0.0
      %361 = vmatprep.subr.mxu0 0.0
      %362 = vmatpush1.msra.mxu0 0.0
      %363 = vmatprep.subr.mxu0 0.0
      %364 = vmatpush1.msra.mxu0 0.0
      %365 = vmatprep.subr.mxu0 0.0
      %366 = vmatpush1.msra.mxu0 0.0
      %367 = vmatprep.subr.mxu0 0.0
      %368 = vmatpush1.msra.mxu0 0.0
      %369 = vmatprep.subr.mxu0 0.0
      %370 = vmatpush1.msra.mxu0 0.0
      %371 = vmatprep.subr.mxu0 0.0
      %372 = vmatpush1.msra.mxu0 0.0
      %373 = vmatprep.subr.mxu0 0.0
      %374 = vmatpush1.msra.mxu0 0.0
      %375 = vmatprep.subr.mxu0 0.0
      %376 = vmatpush1.msra.mxu0 0.0
      %377 = vmatprep.subr.mxu0 0.0
      %378 = vmatpush1.msra.mxu0 0.0
      %379 = vmatprep.subr.mxu0 %v252
      %380 = vmatpush1.msra.mxu0 %v250
      %381 = vmatprep.subr.mxu0 0.0
      %382 = vmatpush2.msra.mxu0 0.0
      %383 = vmatprep.subr.mxu0 0.0
      %384 = vmatpush2.msra.mxu0 0.0
      %385 = vmatprep.subr.mxu0 0.0
      %386 = vmatpush2.msra.mxu0 0.0
      %387 = vmatprep.subr.mxu0 0.0
      %388 = vmatpush2.msra.mxu0 0.0
      %389 = vmatprep.subr.mxu0 0.0
      %390 = vmatpush2.msra.mxu0 0.0
      %391 = vmatprep.subr.mxu0 0.0
      %392 = vmatpush2.msra.mxu0 0.0
      %393 = vmatprep.subr.mxu0 0.0
      %394 = vmatpush2.msra.mxu0 0.0
      %395 = vmatprep.subr.mxu0 0.0
      %396 = vmatpush2.msra.mxu0 0.0
      %397 = vmatprep.subr.mxu0 0.0
      %398 = vmatpush2.msra.mxu0 0.0
      %399 = vmatprep.subr.mxu0 0.0
      %400 = vmatpush2.msra.mxu0 0.0
      %401 = vmatprep.subr.mxu0 0.0
      %402 = vmatpush2.msra.mxu0 0.0
      %403 = vmatprep.subr.mxu0 0.0
      %404 = vmatpush2.msra.mxu0 0.0
      %405 = vmatprep.subr.mxu0 0.0
      %406 = vmatpush2.msra.mxu0 0.0
      %407 = vmatprep.subr.mxu0 0.0
      %408 = vmatpush2.msra.mxu0 0.0
      %409 = vmatprep.subr.mxu0 0.0
      %410 = vmatpush2.msra.mxu0 0.0
      %411 = vmatprep.subr.mxu0 0.0
      %412 = vmatpush2.msra.mxu0 0.0
      %413 = vmatprep.mubr.f32.mxu0 0.0
      %414 = vmatmul.mubr.f32.gmra.mxu0 %v243
      %v415 = vpop.f32.mrf.mxu0
      %v416 = vadd.f32 %v223, %v415
      %v417 = vpop.f32.mrf.mxu0
      %v418 = vadd.f32 %v223, %v417
      %419 = vdwg.mxu0
      %420 = vmatprep.subr.mxu0 0.0
      %421 = vmatpush1.msra.mxu0 0.0
      %422 = vmatprep.subr.mxu0 0.0
      %423 = vmatpush1.msra.mxu0 0.0
      %424 = vmatprep.subr.mxu0 0.0
      %425 = vmatpush1.msra.mxu0 0.0
      %426 = vmatprep.subr.mxu0 0.0
      %427 = vmatpush1.msra.mxu0 0.0
      %428 = vmatprep.subr.mxu0 0.0
      %429 = vmatpush1.msra.mxu0 0.0
      %430 = vmatprep.subr.mxu0 0.0
      %431 = vmatpush1.msra.mxu0 0.0
      %432 = vmatprep.subr.mxu0 0.0
      %433 = vmatpush1.msra.mxu0 0.0
      %434 = vmatprep.subr.mxu0 0.0
      %435 = vmatpush1.msra.mxu0 0.0
      %436 = vmatprep.subr.mxu0 0.0
      %437 = vmatpush1.msra.mxu0 0.0
      %438 = vmatprep.subr.mxu0 0.0
      %439 = vmatpush1.msra.mxu0 0.0
      %440 = vmatprep.subr.mxu0 0.0
      %441 = vmatpush1.msra.mxu0 0.0
      %442 = vmatprep.subr.mxu0 0.0
      %443 = vmatpush1.msra.mxu0 0.0
      %444 = vmatprep.subr.mxu0 0.0
      %445 = vmatpush1.msra.mxu0 0.0
      %446 = vmatprep.subr.mxu0 0.0
      %447 = vmatpush1.msra.mxu0 0.0
      %448 = vmatprep.subr.mxu0 0.0
      %449 = vmatpush1.msra.mxu0 0.0
      %450 = vmatprep.subr.mxu0 %v256
      %451 = vmatpush1.msra.mxu0 %v254
      %452 = vmatprep.subr.mxu0 0.0
      %453 = vmatpush2.msra.mxu0 0.0
      %454 = vmatprep.subr.mxu0 0.0
      %455 = vmatpush2.msra.mxu0 0.0
      %456 = vmatprep.subr.mxu0 0.0
      %457 = vmatpush2.msra.mxu0 0.0
      %458 = vmatprep.subr.mxu0 0.0
      %459 = vmatpush2.msra.mxu0 0.0
      %460 = vmatprep.subr.mxu0 0.0
      %461 = vmatpush2.msra.mxu0 0.0
      %462 = vmatprep.subr.mxu0 0.0
      %463 = vmatpush2.msra.mxu0 0.0
      %464 = vmatprep.subr.mxu0 0.0
      %465 = vmatpush2.msra.mxu0 0.0
      %466 = vmatprep.subr.mxu0 0.0
      %467 = vmatpush2.msra.mxu0 0.0
      %468 = vmatprep.subr.mxu0 0.0
      %469 = vmatpush2.msra.mxu0 0.0
      %470 = vmatprep.subr.mxu0 0.0
      %471 = vmatpush2.msra.mxu0 0.0
      %472 = vmatprep.subr.mxu0 0.0
      %473 = vmatpush2.msra.mxu0 0.0
      %474 = vmatprep.subr.mxu0 0.0
      %475 = vmatpush2.msra.mxu0 0.0
      %476 = vmatprep.subr.mxu0 0.0
      %477 = vmatpush2.msra.mxu0 0.0
      %478 = vmatprep.subr.mxu0 0.0
      %479 = vmatpush2.msra.mxu0 0.0
      %480 = vmatprep.subr.mxu0 0.0
      %481 = vmatpush2.msra.mxu0 0.0
      %482 = vmatprep.subr.mxu0 0.0
      %483 = vmatpush2.msra.mxu0 0.0
      %484 = vmatprep.mubr.f32.mxu0 0.0
      %485 = vmatmul.mubr.f32.gmra.mxu0 %v243
      %v486 = vpop.f32.mrf.mxu0
      %v487 = vadd.f32 %v223, %v486
      %v488 = vpop.f32.mrf.mxu0
      %v489 = vadd.f32 %v223, %v488
      %490 = vdwg.mxu0
      %491 = vmatprep.subr.mxu0 0.0
      %492 = vmatpush1.msra.mxu0 0.0
      %493 = vmatprep.subr.mxu0 0.0
      %494 = vmatpush1.msra.mxu0 0.0
      %495 = vmatprep.subr.mxu0 0.0
      %496 = vmatpush1.msra.mxu0 0.0
      %497 = vmatprep.subr.mxu0 0.0
      %498 = vmatpush1.msra.mxu0 0.0
      %499 = vmatprep.subr.mxu0 0.0
      %500 = vmatpush1.msra.mxu0 0.0
      %501 = vmatprep.subr.mxu0 0.0
      %502 = vmatpush1.msra.mxu0 0.0
      %503 = vmatprep.subr.mxu0 0.0
      %504 = vmatpush1.msra.mxu0 0.0
      %505 = vmatprep.subr.mxu0 0.0
      %506 = vmatpush1.msra.mxu0 0.0
      %507 = vmatprep.subr.mxu0 0.0
      %508 = vmatpush1.msra.mxu0 0.0
      %509 = vmatprep.subr.mxu0 0.0
      %510 = vmatpush1.msra.mxu0 0.0
      %511 = vmatprep.subr.mxu0 0.0
      %512 = vmatpush1.msra.mxu0 0.0
      %513 = vmatprep.subr.mxu0 0.0
      %514 = vmatpush1.msra.mxu0 0.0
      %515 = vmatprep.subr.mxu0 0.0
      %516 = vmatpush1.msra.mxu0 0.0
      %517 = vmatprep.subr.mxu0 0.0
      %518 = vmatpush1.msra.mxu0 0.0
      %519 = vmatprep.subr.mxu0 0.0
      %520 = vmatpush1.msra.mxu0 0.0
      %521 = vmatprep.subr.mxu0 %v260
      %522 = vmatpush1.msra.mxu0 %v258
      %523 = vmatprep.subr.mxu0 0.0
      %524 = vmatpush2.msra.mxu0 0.0
      %525 = vmatprep.subr.mxu0 0.0
      %526 = vmatpush2.msra.mxu0 0.0
      %527 = vmatprep.subr.mxu0 0.0
      %528 = vmatpush2.msra.mxu0 0.0
      %529 = vmatprep.subr.mxu0 0.0
      %530 = vmatpush2.msra.mxu0 0.0
      %531 = vmatprep.subr.mxu0 0.0
      %532 = vmatpush2.msra.mxu0 0.0
      %533 = vmatprep.subr.mxu0 0.0
      %534 = vmatpush2.msra.mxu0 0.0
      %535 = vmatprep.subr.mxu0 0.0
      %536 = vmatpush2.msra.mxu0 0.0
      %537 = vmatprep.subr.mxu0 0.0
      %538 = vmatpush2.msra.mxu0 0.0
      %539 = vmatprep.subr.mxu0 0.0
      %540 = vmatpush2.msra.mxu0 0.0
      %541 = vmatprep.subr.mxu0 0.0
      %542 = vmatpush2.msra.mxu0 0.0
      %543 = vmatprep.subr.mxu0 0.0
      %544 = vmatpush2.msra.mxu0 0.0
      %545 = vmatprep.subr.mxu0 0.0
      %546 = vmatpush2.msra.mxu0 0.0
      %547 = vmatprep.subr.mxu0 0.0
      %548 = vmatpush2.msra.mxu0 0.0
      %549 = vmatprep.subr.mxu0 0.0
      %550 = vmatpush2.msra.mxu0 0.0
      %551 = vmatprep.subr.mxu0 0.0
      %552 = vmatpush2.msra.mxu0 0.0
      %553 = vmatprep.subr.mxu0 0.0
      %554 = vmatpush2.msra.mxu0 0.0
      %555 = vmatprep.mubr.f32.mxu0 0.0
      %556 = vmatmul.mubr.f32.gmra.mxu0 %v243
      %v557 = vpop.f32.mrf.mxu0
      %v558 = vadd.f32 %v223, %v557
      %v559 = vpop.f32.mrf.mxu0
      %v560 = vadd.f32 %v223, %v559
      %561 = vdwg.mxu0
      %562 = vmatprep.subr.mxu0 0.0
      %563 = vmatpush1.msra.mxu0 0.0
      %564 = vmatprep.subr.mxu0 0.0
      %565 = vmatpush1.msra.mxu0 0.0
      %566 = vmatprep.subr.mxu0 0.0
      %567 = vmatpush1.msra.mxu0 0.0
      %568 = vmatprep.subr.mxu0 0.0
      %569 = vmatpush1.msra.mxu0 0.0
      %570 = vmatprep.subr.mxu0 0.0
      %571 = vmatpush1.msra.mxu0 0.0
      %572 = vmatprep.subr.mxu0 0.0
      %573 = vmatpush1.msra.mxu0 0.0
      %574 = vmatprep.subr.mxu0 0.0
      %575 = vmatpush1.msra.mxu0 0.0
      %576 = vmatprep.subr.mxu0 0.0
      %577 = vmatpush1.msra.mxu0 0.0
      %578 = vmatprep.subr.mxu0 0.0
      %579 = vmatpush1.msra.mxu0 0.0
      %580 = vmatprep.subr.mxu0 0.0
      %581 = vmatpush1.msra.mxu0 0.0
      %582 = vmatprep.subr.mxu0 0.0
      %583 = vmatpush1.msra.mxu0 0.0
      %584 = vmatprep.subr.mxu0 0.0
      %585 = vmatpush1.msra.mxu0 0.0
      %586 = vmatprep.subr.mxu0 0.0
      %587 = vmatpush1.msra.mxu0 0.0
      %588 = vmatprep.subr.mxu0 0.0
      %589 = vmatpush1.msra.mxu0 0.0
      %590 = vmatprep.subr.mxu0 0.0
      %591 = vmatpush1.msra.mxu0 0.0
      %592 = vmatprep.subr.mxu0 %v264
      %593 = vmatpush1.msra.mxu0 %v262
      %594 = vmatprep.subr.mxu0 0.0
      %595 = vmatpush2.msra.mxu0 0.0
      %596 = vmatprep.subr.mxu0 0.0
      %597 = vmatpush2.msra.mxu0 0.0
      %598 = vmatprep.subr.mxu0 0.0
      %599 = vmatpush2.msra.mxu0 0.0
      %600 = vmatprep.subr.mxu0 0.0
      %601 = vmatpush2.msra.mxu0 0.0
      %602 = vmatprep.subr.mxu0 0.0
      %603 = vmatpush2.msra.mxu0 0.0
      %604 = vmatprep.subr.mxu0 0.0
      %605 = vmatpush2.msra.mxu0 0.0
      %606 = vmatprep.subr.mxu0 0.0
      %607 = vmatpush2.msra.mxu0 0.0
      %608 = vmatprep.subr.mxu0 0.0
      %609 = vmatpush2.msra.mxu0 0.0
      %610 = vmatprep.subr.mxu0 0.0
      %611 = vmatpush2.msra.mxu0 0.0
      %612 = vmatprep.subr.mxu0 0.0
      %613 = vmatpush2.msra.mxu0 0.0
      %614 = vmatprep.subr.mxu0 0.0
      %615 = vmatpush2.msra.mxu0 0.0
      %616 = vmatprep.subr.mxu0 0.0
      %617 = vmatpush2.msra.mxu0 0.0
      %618 = vmatprep.subr.mxu0 0.0
      %619 = vmatpush2.msra.mxu0 0.0
      %620 = vmatprep.subr.mxu0 0.0
      %621 = vmatpush2.msra.mxu0 0.0
      %622 = vmatprep.subr.mxu0 0.0
      %623 = vmatpush2.msra.mxu0 0.0
      %624 = vmatprep.subr.mxu0 0.0
      %625 = vmatpush2.msra.mxu0 0.0
      %626 = vmatprep.mubr.f32.mxu0 0.0
      %627 = vmatmul.mubr.f32.gmra.mxu0 %v243
      %v628 = vpop.f32.mrf.mxu0
      %v629 = vadd.f32 %v223, %v628
      %v630 = vpop.f32.mrf.mxu0
      %v631 = vadd.f32 %v223, %v630
      %632 = vdwg.mxu0
      %633 = vmatprep.subr.mxu0 0.0
      %634 = vmatpush1.msra.mxu0 0.0
      %635 = vmatprep.subr.mxu0 0.0
      %636 = vmatpush1.msra.mxu0 0.0
      %637 = vmatprep.subr.mxu0 0.0
      %638 = vmatpush1.msra.mxu0 0.0
      %639 = vmatprep.subr.mxu0 0.0
      %640 = vmatpush1.msra.mxu0 0.0
      %641 = vmatprep.subr.mxu0 0.0
      %642 = vmatpush1.msra.mxu0 0.0
      %643 = vmatprep.subr.mxu0 0.0
      %644 = vmatpush1.msra.mxu0 0.0
      %645 = vmatprep.subr.mxu0 0.0
      %646 = vmatpush1.msra.mxu0 0.0
      %647 = vmatprep.subr.mxu0 0.0
      %648 = vmatpush1.msra.mxu0 0.0
      %649 = vmatprep.subr.mxu0 0.0
      %650 = vmatpush1.msra.mxu0 0.0
      %651 = vmatprep.subr.mxu0 0.0
      %652 = vmatpush1.msra.mxu0 0.0
      %653 = vmatprep.subr.mxu0 0.0
      %654 = vmatpush1.msra.mxu0 0.0
      %655 = vmatprep.subr.mxu0 0.0
      %656 = vmatpush1.msra.mxu0 0.0
      %657 = vmatprep.subr.mxu0 0.0
      %658 = vmatpush1.msra.mxu0 0.0
      %659 = vmatprep.subr.mxu0 0.0
      %660 = vmatpush1.msra.mxu0 0.0
      %661 = vmatprep.subr.mxu0 0.0
      %662 = vmatpush1.msra.mxu0 0.0
      %663 = vmatprep.subr.mxu0 %v268
      %664 = vmatpush1.msra.mxu0 %v266
      %665 = vmatprep.subr.mxu0 0.0
      %666 = vmatpush2.msra.mxu0 0.0
      %667 = vmatprep.subr.mxu0 0.0
      %668 = vmatpush2.msra.mxu0 0.0
      %669 = vmatprep.subr.mxu0 0.0
      %670 = vmatpush2.msra.mxu0 0.0
      %671 = vmatprep.subr.mxu0 0.0
      %672 = vmatpush2.msra.mxu0 0.0
      %673 = vmatprep.subr.mxu0 0.0
      %674 = vmatpush2.msra.mxu0 0.0
      %675 = vmatprep.subr.mxu0 0.0
      %676 = vmatpush2.msra.mxu0 0.0
      %677 = vmatprep.subr.mxu0 0.0
      %678 = vmatpush2.msra.mxu0 0.0
      %679 = vmatprep.subr.mxu0 0.0
      %680 = vmatpush2.msra.mxu0 0.0
      %681 = vmatprep.subr.mxu0 0.0
      %682 = vmatpush2.msra.mxu0 0.0
      %683 = vmatprep.subr.mxu0 0.0
      %684 = vmatpush2.msra.mxu0 0.0
      %685 = vmatprep.subr.mxu0 0.0
      %686 = vmatpush2.msra.mxu0 0.0
      %687 = vmatprep.subr.mxu0 0.0
      %688 = vmatpush2.msra.mxu0 0.0
      %689 = vmatprep.subr.mxu0 0.0
      %690 = vmatpush2.msra.mxu0 0.0
      %691 = vmatprep.subr.mxu0 0.0
      %692 = vmatpush2.msra.mxu0 0.0
      %693 = vmatprep.subr.mxu0 0.0
      %694 = vmatpush2.msra.mxu0 0.0
      %695 = vmatprep.subr.mxu0 0.0
      %696 = vmatpush2.msra.mxu0 0.0
      %697 = vmatprep.mubr.f32.mxu0 0.0
      %698 = vmatmul.mubr.f32.gmra.mxu0 %v243
      %v699 = vpop.f32.mrf.mxu0
      %v700 = vadd.f32 %v223, %v699
      %v701 = vpop.f32.mrf.mxu0
      %v702 = vadd.f32 %v223, %v701
      %703 = vdwg.mxu0
      %704 = vmatprep.subr.mxu0 0.0
      %705 = vmatpush1.msra.mxu0 0.0
      %706 = vmatprep.subr.mxu0 0.0
      %707 = vmatpush1.msra.mxu0 0.0
      %708 = vmatprep.subr.mxu0 0.0
      %709 = vmatpush1.msra.mxu0 0.0
      %710 = vmatprep.subr.mxu0 0.0
      %711 = vmatpush1.msra.mxu0 0.0
      %712 = vmatprep.subr.mxu0 0.0
      %713 = vmatpush1.msra.mxu0 0.0
      %714 = vmatprep.subr.mxu0 0.0
      %715 = vmatpush1.msra.mxu0 0.0
      %716 = vmatprep.subr.mxu0 0.0
      %717 = vmatpush1.msra.mxu0 0.0
      %718 = vmatprep.subr.mxu0 0.0
      %719 = vmatpush1.msra.mxu0 0.0
      %720 = vmatprep.subr.mxu0 0.0
      %721 = vmatpush1.msra.mxu0 0.0
      %722 = vmatprep.subr.mxu0 0.0
      %723 = vmatpush1.msra.mxu0 0.0
      %724 = vmatprep.subr.mxu0 0.0
      %725 = vmatpush1.msra.mxu0 0.0
      %726 = vmatprep.subr.mxu0 0.0
      %727 = vmatpush1.msra.mxu0 0.0
      %728 = vmatprep.subr.mxu0 0.0
      %729 = vmatpush1.msra.mxu0 0.0
      %730 = vmatprep.subr.mxu0 0.0
      %731 = vmatpush1.msra.mxu0 0.0
      %732 = vmatprep.subr.mxu0 0.0
      %733 = vmatpush1.msra.mxu0 0.0
      %734 = vmatprep.subr.mxu0 %v272
      %735 = vmatpush1.msra.mxu0 %v270
      %736 = vmatprep.subr.mxu0 0.0
      %737 = vmatpush2.msra.mxu0 0.0
      %738 = vmatprep.subr.mxu0 0.0
      %739 = vmatpush2.msra.mxu0 0.0
      %740 = vmatprep.subr.mxu0 0.0
      %741 = vmatpush2.msra.mxu0 0.0
      %742 = vmatprep.subr.mxu0 0.0
      %743 = vmatpush2.msra.mxu0 0.0
      %744 = vmatprep.subr.mxu0 0.0
      %745 = vmatpush2.msra.mxu0 0.0
      %746 = vmatprep.subr.mxu0 0.0
      %747 = vmatpush2.msra.mxu0 0.0
      %748 = vmatprep.subr.mxu0 0.0
      %749 = vmatpush2.msra.mxu0 0.0
      %750 = vmatprep.subr.mxu0 0.0
      %751 = vmatpush2.msra.mxu0 0.0
      %752 = vmatprep.subr.mxu0 0.0
      %753 = vmatpush2.msra.mxu0 0.0
      %754 = vmatprep.subr.mxu0 0.0
      %755 = vmatpush2.msra.mxu0 0.0
      %756 = vmatprep.subr.mxu0 0.0
      %757 = vmatpush2.msra.mxu0 0.0
      %758 = vmatprep.subr.mxu0 0.0
      %759 = vmatpush2.msra.mxu0 0.0
      %760 = vmatprep.subr.mxu0 0.0
      %761 = vmatpush2.msra.mxu0 0.0
      %762 = vmatprep.subr.mxu0 0.0
      %763 = vmatpush2.msra.mxu0 0.0
      %764 = vmatprep.subr.mxu0 0.0
      %765 = vmatpush2.msra.mxu0 0.0
      %766 = vmatprep.subr.mxu0 0.0
      %767 = vmatpush2.msra.mxu0 0.0
      %768 = vmatprep.mubr.f32.mxu0 0.0
      %769 = vmatmul.mubr.f32.gmra.mxu0 %v243
      %v770 = vpop.f32.mrf.mxu0
      %v771 = vadd.f32 %v223, %v770
      %v772 = vpop.f32.mrf.mxu0
      %v773 = vadd.f32 %v223, %v772
      %774 = vdwg.mxu0
      %775 = vmatprep.subr.mxu0 0.0
      %776 = vmatpush1.msra.mxu0 0.0
      %777 = vmatprep.subr.mxu0 0.0
      %778 = vmatpush1.msra.mxu0 0.0
      %779 = vmatprep.subr.mxu0 0.0
      %780 = vmatpush1.msra.mxu0 0.0
      %781 = vmatprep.subr.mxu0 0.0
      %782 = vmatpush1.msra.mxu0 0.0
      %783 = vmatprep.subr.mxu0 0.0
      %784 = vmatpush1.msra.mxu0 0.0
      %785 = vmatprep.subr.mxu0 0.0
      %786 = vmatpush1.msra.mxu0 0.0
      %787 = vmatprep.subr.mxu0 0.0
      %788 = vmatpush1.msra.mxu0 0.0
      %789 = vmatprep.subr.mxu0 0.0
      %790 = vmatpush1.msra.mxu0 0.0
      %791 = vmatprep.subr.mxu0 0.0
      %792 = vmatpush1.msra.mxu0 0.0
      %793 = vmatprep.subr.mxu0 0.0
      %794 = vmatpush1.msra.mxu0 0.0
      %795 = vmatprep.subr.mxu0 0.0
      %796 = vmatpush1.msra.mxu0 0.0
      %797 = vmatprep.subr.mxu0 0.0
      %798 = vmatpush1.msra.mxu0 0.0
      %799 = vmatprep.subr.mxu0 0.0
      %800 = vmatpush1.msra.mxu0 0.0
      %801 = vmatprep.subr.mxu0 0.0
      %802 = vmatpush1.msra.mxu0 0.0
      %803 = vmatprep.subr.mxu0 0.0
      %804 = vmatpush1.msra.mxu0 0.0
      %805 = vmatprep.subr.mxu0 %v276
      %806 = vmatpush1.msra.mxu0 %v274
      %807 = vmatprep.subr.mxu0 0.0
      %808 = vmatpush2.msra.mxu0 0.0
      %809 = vmatprep.subr.mxu0 0.0
      %810 = vmatpush2.msra.mxu0 0.0
      %811 = vmatprep.subr.mxu0 0.0
      %812 = vmatpush2.msra.mxu0 0.0
      %813 = vmatprep.subr.mxu0 0.0
      %814 = vmatpush2.msra.mxu0 0.0
      %815 = vmatprep.subr.mxu0 0.0
      %816 = vmatpush2.msra.mxu0 0.0
      %817 = vmatprep.subr.mxu0 0.0
      %818 = vmatpush2.msra.mxu0 0.0
      %819 = vmatprep.subr.mxu0 0.0
      %820 = vmatpush2.msra.mxu0 0.0
      %821 = vmatprep.subr.mxu0 0.0
      %822 = vmatpush2.msra.mxu0 0.0
      %823 = vmatprep.subr.mxu0 0.0
      %824 = vmatpush2.msra.mxu0 0.0
      %825 = vmatprep.subr.mxu0 0.0
      %826 = vmatpush2.msra.mxu0 0.0
      %827 = vmatprep.subr.mxu0 0.0
      %828 = vmatpush2.msra.mxu0 0.0
      %829 = vmatprep.subr.mxu0 0.0
      %830 = vmatpush2.msra.mxu0 0.0
      %831 = vmatprep.subr.mxu0 0.0
      %832 = vmatpush2.msra.mxu0 0.0
      %833 = vmatprep.subr.mxu0 0.0
      %834 = vmatpush2.msra.mxu0 0.0
      %835 = vmatprep.subr.mxu0 0.0
      %836 = vmatpush2.msra.mxu0 0.0
      %837 = vmatprep.subr.mxu0 0.0
      %838 = vmatpush2.msra.mxu0 0.0
      %839 = vmatprep.mubr.f32.mxu0 0.0
      %840 = vmatmul.mubr.f32.gmra.mxu0 %v243
      %v841 = vpop.f32.mrf.mxu0
      %v842 = vadd.f32 %v223, %v841
      %v843 = vpop.f32.mrf.mxu0
      %v844 = vadd.f32 %v223, %v843
      %845 = vdwg.mxu0
      %vm846 = vcmask 1042432
      %v847 = vsel %vm846, %v345, -inf
      %v848 = vrot.slane %v847, 4
      %v849 = vmax.f32 %v847, %v848
      %v850 = vrot.slane %v849, 2
      %v851 = vmax.f32 %v849, %v850
      %v852 = vrot.slane %v851, 1
      %v853 = vmax.f32 %v851, %v852
      %v854 = vsel %vm846, %v347, -inf
      %v855 = vrot.slane %v854, 4
      %v856 = vmax.f32 %v854, %v855
      %v857 = vrot.slane %v856, 2
      %v858 = vmax.f32 %v856, %v857
      %v859 = vrot.slane %v858, 1
      %v860 = vmax.f32 %v858, %v859
      %v861 = vsel %vm846, %v416, -inf
      %v862 = vrot.slane %v861, 4
      %v863 = vmax.f32 %v861, %v862
      %v864 = vrot.slane %v863, 2
      %v865 = vmax.f32 %v863, %v864
      %v866 = vrot.slane %v865, 1
      %v867 = vmax.f32 %v865, %v866
      %v868 = vsel %vm846, %v418, -inf
      %v869 = vrot.slane %v868, 4
      %v870 = vmax.f32 %v868, %v869
      %v871 = vrot.slane %v870, 2
      %v872 = vmax.f32 %v870, %v871
      %v873 = vrot.slane %v872, 1
      %v874 = vmax.f32 %v872, %v873
      %v875 = vsel %vm846, %v487, -inf
      %v876 = vrot.slane %v875, 4
      %v877 = vmax.f32 %v875, %v876
      %v878 = vrot.slane %v877, 2
      %v879 = vmax.f32 %v877, %v878
      %v880 = vrot.slane %v879, 1
      %v881 = vmax.f32 %v879, %v880
      %v882 = vsel %vm846, %v489, -inf
      %v883 = vrot.slane %v882, 4
      %v884 = vmax.f32 %v882, %v883
      %v885 = vrot.slane %v884, 2
      %v886 = vmax.f32 %v884, %v885
      %v887 = vrot.slane %v886, 1
      %v888 = vmax.f32 %v886, %v887
      %v889 = vsel %vm846, %v558, -inf
      %v890 = vrot.slane %v889, 4
      %v891 = vmax.f32 %v889, %v890
      %v892 = vrot.slane %v891, 2
      %v893 = vmax.f32 %v891, %v892
      %v894 = vrot.slane %v893, 1
      %v895 = vmax.f32 %v893, %v894
      %v896 = vsel %vm846, %v560, -inf
      %v897 = vrot.slane %v896, 4
      %v898 = vmax.f32 %v896, %v897
      %v899 = vrot.slane %v898, 2
      %v900 = vmax.f32 %v898, %v899
      %v901 = vrot.slane %v900, 1
      %v902 = vmax.f32 %v900, %v901
      %v903 = vsel %vm846, %v629, -inf
      %v904 = vrot.slane %v903, 4
      %v905 = vmax.f32 %v903, %v904
      %v906 = vrot.slane %v905, 2
      %v907 = vmax.f32 %v905, %v906
      %v908 = vrot.slane %v907, 1
      %v909 = vmax.f32 %v907, %v908
      %v910 = vsel %vm846, %v631, -inf
      %v911 = vrot.slane %v910, 4
      %v912 = vmax.f32 %v910, %v911
      %v913 = vrot.slane %v912, 2
      %v914 = vmax.f32 %v912, %v913
      %v915 = vrot.slane %v914, 1
      %v916 = vmax.f32 %v914, %v915
      %v917 = vsel %vm846, %v700, -inf
      %v918 = vrot.slane %v917, 4
      %v919 = vmax.f32 %v917, %v918
      %v920 = vrot.slane %v919, 2
      %v921 = vmax.f32 %v919, %v920
      %v922 = vrot.slane %v921, 1
      %v923 = vmax.f32 %v921, %v922
      %v924 = vsel %vm846, %v702, -inf
      %v925 = vrot.slane %v924, 4
      %v926 = vmax.f32 %v924, %v925
      %v927 = vrot.slane %v926, 2
      %v928 = vmax.f32 %v926, %v927
      %v929 = vrot.slane %v928, 1
      %v930 = vmax.f32 %v928, %v929
      %v931 = vsel %vm846, %v771, -inf
      %v932 = vrot.slane %v931, 4
      %v933 = vmax.f32 %v931, %v932
      %v934 = vrot.slane %v933, 2
      %v935 = vmax.f32 %v933, %v934
      %v936 = vrot.slane %v935, 1
      %v937 = vmax.f32 %v935, %v936
      %v938 = vsel %vm846, %v773, -inf
      %v939 = vrot.slane %v938, 4
      %v940 = vmax.f32 %v938, %v939
      %v941 = vrot.slane %v940, 2
      %v942 = vmax.f32 %v940, %v941
      %v943 = vrot.slane %v942, 1
      %v944 = vmax.f32 %v942, %v943
      %v945 = vsel %vm846, %v842, -inf
      %v946 = vrot.slane %v945, 4
      %v947 = vmax.f32 %v945, %v946
      %v948 = vrot.slane %v947, 2
      %v949 = vmax.f32 %v947, %v948
      %v950 = vrot.slane %v949, 1
      %v951 = vmax.f32 %v949, %v950
      %v952 = vsel %vm846, %v844, -inf
      %v953 = vrot.slane %v952, 4
      %v954 = vmax.f32 %v952, %v953
      %v955 = vrot.slane %v954, 2
      %v956 = vmax.f32 %v954, %v955
      %v957 = vrot.slane %v956, 1
      %v958 = vmax.f32 %v956, %v957
      %v959 = vsub.f32 %v345, %v853
      %v960 = vsub.f32 %v347, %v860
      %v961 = vsub.f32 %v416, %v867
      %v962 = vsub.f32 %v418, %v874
      %v963 = vsub.f32 %v487, %v881
      %v964 = vsub.f32 %v489, %v888
      %v965 = vsub.f32 %v558, %v895
      %v966 = vsub.f32 %v560, %v902
      %v967 = vsub.f32 %v629, %v909
      %v968 = vsub.f32 %v631, %v916
      %v969 = vsub.f32 %v700, %v923
      %v970 = vsub.f32 %v702, %v930
      %v971 = vsub.f32 %v771, %v937
      %v972 = vsub.f32 %v773, %v944
      %v973 = vsub.f32 %v842, %v951
      %v974 = vsub.f32 %v844, %v958
      %v975 = vmul.f32 %v959, 1.442695
      %v976 = vpow.pop %v975
      %v977 = vmul.f32 %v960, 1.442695
      %v978 = vpow.pop %v977
      %v979 = vmul.f32 %v961, 1.442695
      %v980 = vpow.pop %v979
      %v981 = vmul.f32 %v962, 1.442695
      %v982 = vpow.pop %v981
      %v983 = vmul.f32 %v963, 1.442695
      %v984 = vpow.pop %v983
      %v985 = vmul.f32 %v964, 1.442695
      %v986 = vpow.pop %v985
      %v987 = vmul.f32 %v965, 1.442695
      %v988 = vpow.pop %v987
      %v989 = vmul.f32 %v966, 1.442695
      %v990 = vpow.pop %v989
      %v991 = vmul.f32 %v967, 1.442695
      %v992 = vpow.pop %v991
      %v993 = vmul.f32 %v968, 1.442695
      %v994 = vpow.pop %v993
      %v995 = vmul.f32 %v969, 1.442695
      %v996 = vpow.pop %v995
      %v997 = vmul.f32 %v970, 1.442695
      %v998 = vpow.pop %v997
      %v999 = vmul.f32 %v971, 1.442695
      %v1000 = vpow.pop %v999
      %v1001 = vmul.f32 %v972, 1.442695
      %v1002 = vpow.pop %v1001
      %v1003 = vmul.f32 %v973, 1.442695
      %v1004 = vpow.pop %v1003
      %v1005 = vmul.f32 %v974, 1.442695
      %v1006 = vpow.pop %v1005
      %v1007 = vsel %vm846, %v976, 0.0
      %v1008 = vrot.slane %v1007, 4
      %v1009 = vadd.f32 %v1007, %v1008
      %v1010 = vrot.slane %v1009, 2
      %v1011 = vadd.f32 %v1009, %v1010
      %v1012 = vrot.slane %v1011, 1
      %v1013 = vadd.f32 %v1011, %v1012
      %v1014 = vsel %vm846, %v978, 0.0
      %v1015 = vrot.slane %v1014, 4
      %v1016 = vadd.f32 %v1014, %v1015
      %v1017 = vrot.slane %v1016, 2
      %v1018 = vadd.f32 %v1016, %v1017
      %v1019 = vrot.slane %v1018, 1
      %v1020 = vadd.f32 %v1018, %v1019
      %v1021 = vsel %vm846, %v980, 0.0
      %v1022 = vrot.slane %v1021, 4
      %v1023 = vadd.f32 %v1021, %v1022
      %v1024 = vrot.slane %v1023, 2
      %v1025 = vadd.f32 %v1023, %v1024
      %v1026 = vrot.slane %v1025, 1
      %v1027 = vadd.f32 %v1025, %v1026
      %v1028 = vsel %vm846, %v982, 0.0
      %v1029 = vrot.slane %v1028, 4
      %v1030 = vadd.f32 %v1028, %v1029
      %v1031 = vrot.slane %v1030, 2
      %v1032 = vadd.f32 %v1030, %v1031
      %v1033 = vrot.slane %v1032, 1
      %v1034 = vadd.f32 %v1032, %v1033
      %v1035 = vsel %vm846, %v984, 0.0
      %v1036 = vrot.slane %v1035, 4
      %v1037 = vadd.f32 %v1035, %v1036
      %v1038 = vrot.slane %v1037, 2
      %v1039 = vadd.f32 %v1037, %v1038
      %v1040 = vrot.slane %v1039, 1
      %v1041 = vadd.f32 %v1039, %v1040
      %v1042 = vsel %vm846, %v986, 0.0
      %v1043 = vrot.slane %v1042, 4
      %v1044 = vadd.f32 %v1042, %v1043
      %v1045 = vrot.slane %v1044, 2
      %v1046 = vadd.f32 %v1044, %v1045
      %v1047 = vrot.slane %v1046, 1
      %v1048 = vadd.f32 %v1046, %v1047
      %v1049 = vsel %vm846, %v988, 0.0
      %v1050 = vrot.slane %v1049, 4
      %v1051 = vadd.f32 %v1049, %v1050
      %v1052 = vrot.slane %v1051, 2
      %v1053 = vadd.f32 %v1051, %v1052
      %v1054 = vrot.slane %v1053, 1
      %v1055 = vadd.f32 %v1053, %v1054
      %v1056 = vsel %vm846, %v990, 0.0
      %v1057 = vrot.slane %v1056, 4
      %v1058 = vadd.f32 %v1056, %v1057
      %v1059 = vrot.slane %v1058, 2
      %v1060 = vadd.f32 %v1058, %v1059
      %v1061 = vrot.slane %v1060, 1
      %v1062 = vadd.f32 %v1060, %v1061
      %v1063 = vsel %vm846, %v992, 0.0
      %v1064 = vrot.slane %v1063, 4
      %v1065 = vadd.f32 %v1063, %v1064
      %v1066 = vrot.slane %v1065, 2
      %v1067 = vadd.f32 %v1065, %v1066
      %v1068 = vrot.slane %v1067, 1
      %v1069 = vadd.f32 %v1067, %v1068
      %v1070 = vsel %vm846, %v994, 0.0
      %v1071 = vrot.slane %v1070, 4
      %v1072 = vadd.f32 %v1070, %v1071
      %v1073 = vrot.slane %v1072, 2
      %v1074 = vadd.f32 %v1072, %v1073
      %v1075 = vrot.slane %v1074, 1
      %v1076 = vadd.f32 %v1074, %v1075
      %v1077 = vsel %vm846, %v996, 0.0
      %v1078 = vrot.slane %v1077, 4
      %v1079 = vadd.f32 %v1077, %v1078
      %v1080 = vrot.slane %v1079, 2
      %v1081 = vadd.f32 %v1079, %v1080
      %v1082 = vrot.slane %v1081, 1
      %v1083 = vadd.f32 %v1081, %v1082
      %v1084 = vsel %vm846, %v998, 0.0
      %v1085 = vrot.slane %v1084, 4
      %v1086 = vadd.f32 %v1084, %v1085
      %v1087 = vrot.slane %v1086, 2
      %v1088 = vadd.f32 %v1086, %v1087
      %v1089 = vrot.slane %v1088, 1
      %v1090 = vadd.f32 %v1088, %v1089
      %v1091 = vsel %vm846, %v1000, 0.0
      %v1092 = vrot.slane %v1091, 4
      %v1093 = vadd.f32 %v1091, %v1092
      %v1094 = vrot.slane %v1093, 2
      %v1095 = vadd.f32 %v1093, %v1094
      %v1096 = vrot.slane %v1095, 1
      %v1097 = vadd.f32 %v1095, %v1096
      %v1098 = vsel %vm846, %v1002, 0.0
      %v1099 = vrot.slane %v1098, 4
      %v1100 = vadd.f32 %v1098, %v1099
      %v1101 = vrot.slane %v1100, 2
      %v1102 = vadd.f32 %v1100, %v1101
      %v1103 = vrot.slane %v1102, 1
      %v1104 = vadd.f32 %v1102, %v1103
      %v1105 = vsel %vm846, %v1004, 0.0
      %v1106 = vrot.slane %v1105, 4
      %v1107 = vadd.f32 %v1105, %v1106
      %v1108 = vrot.slane %v1107, 2
      %v1109 = vadd.f32 %v1107, %v1108
      %v1110 = vrot.slane %v1109, 1
      %v1111 = vadd.f32 %v1109, %v1110
      %v1112 = vsel %vm846, %v1006, 0.0
      %v1113 = vrot.slane %v1112, 4
      %v1114 = vadd.f32 %v1112, %v1113
      %v1115 = vrot.slane %v1114, 2
      %v1116 = vadd.f32 %v1114, %v1115
      %v1117 = vrot.slane %v1116, 1
      %v1118 = vadd.f32 %v1116, %v1117
      %v1119 = vrcp.pop %v1013
      %v1120 = vmul.f32 %v976, %v1119
      %v1121 = vrcp.pop %v1020
      %v1122 = vmul.f32 %v978, %v1121
      %v1123 = vrcp.pop %v1027
      %v1124 = vmul.f32 %v980, %v1123
      %v1125 = vrcp.pop %v1034
      %v1126 = vmul.f32 %v982, %v1125
      %v1127 = vrcp.pop %v1041
      %v1128 = vmul.f32 %v984, %v1127
      %v1129 = vrcp.pop %v1048
      %v1130 = vmul.f32 %v986, %v1129
      %v1131 = vrcp.pop %v1055
      %v1132 = vmul.f32 %v988, %v1131
      %v1133 = vrcp.pop %v1062
      %v1134 = vmul.f32 %v990, %v1133
      %v1135 = vrcp.pop %v1069
      %v1136 = vmul.f32 %v992, %v1135
      %v1137 = vrcp.pop %v1076
      %v1138 = vmul.f32 %v994, %v1137
      %v1139 = vrcp.pop %v1083
      %v1140 = vmul.f32 %v996, %v1139
      %v1141 = vrcp.pop %v1090
      %v1142 = vmul.f32 %v998, %v1141
      %v1143 = vrcp.pop %v1097
      %v1144 = vmul.f32 %v1000, %v1143
      %v1145 = vrcp.pop %v1104
      %v1146 = vmul.f32 %v1002, %v1145
      %v1147 = vrcp.pop %v1111
      %v1148 = vmul.f32 %v1004, %v1147
      %v1149 = vrcp.pop %v1118
      %v1150 = vmul.f32 %v1006, %v1149
      %v1167 = vcombine.low %v1120, %v1122
      %v1168 = vcombine.low %v1124, %v1126
      %v1169 = vcombine.low %v1128, %v1130
      %v1170 = vcombine.low %v1132, %v1134
      %v1171 = vcombine.low %v1136, %v1138
      %v1172 = vcombine.low %v1140, %v1142
      %v1173 = vcombine.low %v1144, %v1146
      %v1174 = vcombine.low %v1148, %v1150
      %1183 = vst [vmem:[%s208] sm:$0x77] %v1167
      %1184 = vst [vmem:[%s208 + $0x8] sm:$0x77] %v1168
      %1185 = vst [vmem:[%s208 + $0x10] sm:$0x77] %v1169
      %1186 = vst [vmem:[%s208 + $0x18] sm:$0x77] %v1170
      %1187 = vst [vmem:[%s208 + $0x20] sm:$0x77] %v1171
      %1188 = vst [vmem:[%s208 + $0x28] sm:$0x77] %v1172
      %1189 = vst [vmem:[%s208 + $0x30] sm:$0x77] %v1173
      %1190 = vst [vmem:[%s208 + $0x38] sm:$0x77] %v1174
      %s1191 = smul.u32 16, %s19
      %p1192 = scmp.lt.s32.totalorder %s18, 1
      %s1193 = scalar_select %p1192, %s18, 1
      %p1194 = scmp.lt.s32.totalorder %s1191, 31
      %s1195 = scalar_select %p1194, %s1191, 31
      %s1196 = smul.addr %s1193, 32
      %s1197 = sadd.s32 %s1195, %s1196
      %s1198 = smul.addr %s1197, 4
      %s1199 = scalar_lea.vmem %s3, %s1198
      // Predicated region
      $region33: #{out_forward.1} parent=31 // pred_check
        %p1200 = pneg %p116
      $region34: #{out_forward.1} parent=31 // pred_check_branch
        %1202 = sbr.rel (%p1200) target = $region36
      $region35: #{out_forward.1} parent=31 // pred_region
        %s1203 = smul.u32 16, %s19
      $region36: #{out_forward.1} parent=31 // pred_fallthru
        _
    $region32: #{out_forward.1} parent=5 // pred_fallthru
      _
    %p1204 = scmp.le.s32.totalorder 2, %s9
    // Predicated region
    $region37: #{out_forward.1} parent=5 // pred_check
      %p1205 = pneg %p1204
    $region38: #{out_forward.1} parent=5 // pred_check_branch
      %1207 = sbr.rel (%p1205) target = $region40
    $region39: #{out_forward.1} parent=5 // pred_region
      %s1208 = ssub.s32 %s9, 2
      // Predicated region
      $region41: #{out_forward.1} parent=39 // pred_check
        %p1209 = pneg %p122
      $region42: #{out_forward.1} parent=39 // pred_check_branch
        %1211 = sbr.rel (%p1209) target = $region44
      $region43: #{out_forward.1} parent=39 // pred_region
        %s1212 = smul.u32 16, %s21
        %p1213 = scmp.lt.s32.totalorder %s20, 1
        %s1214 = scalar_select %p1213, %s20, 1
        %p1215 = scmp.lt.s32.totalorder %s1212, 31
        %s1216 = scalar_select %p1215, %s1212, 31
        %s1217 = smul.addr %s1214, 32
        %s1218 = sadd.s32 %s1216, %s1217
        %s1219 = smul.addr %s1218, 4
        %s1220 = scalar_lea.vmem %s3, %s1219
      $region44: #{out_forward.1} parent=39 // pred_fallthru
        _
    $region40: #{out_forward.1} parent=5 // pred_fallthru
      _
  $region6: #{out_forward.1} parent=0 // loop_footer
    %s13 = sadd.s32 1, %s9
  $region7: #{out_forward.1} parent=0 // loop_footer_branch
    %8 = sbr.rel target = $region3
  $region8: #{out_forward.1} parent=0 // loop_exit
    _

</llo_original>
